<compile_context>
chip_gen: v6e
topology: v6e:2x2x1
jax: 0.10.0
libtpu: 0.0.40
codegen_flags: <defaults>
</compile_context>

<pallas_src>
import functools

import jax
import jax.numpy as jnp
import numpy as np
from jax.experimental import pallas as pl
from jax.experimental.pallas import tpu as pltpu


def _round_up(x, m):
    return ((x + m - 1) // m) * m


# ----------------------------------------------------------------------------
# Fused kernel: merged block-diagonal GAT + gather + sigmoid + Linear
# ----------------------------------------------------------------------------
def _fused_event_critic_kernel(
        src_ref, dst_ref, up_self_ref, down_self_ref,        # int32 [E_pad,1], [1,E_pad], [B_pad,1], [B_pad,1]
        x_ref, w_ref, up_b_ref, down_b_ref,                   # f32 [N,2F+1], [2F+1,H+4], [1,H], [1,H]
        mlp_w_ref, mlp_b_ref,                                 # f32 [H,128], [1,128]
        out_ref,                                              # f32 [B_pad,128]
        *, hidden):
    # hp = [x_blk | 1] @ [W_blk | W@att_dst^T | 1-col | 1-col | W@att_src^T]  (one MXU pass)
    hp = jnp.dot(x_ref[...], w_ref[...], preferred_element_type=jnp.float32)   # [N, H+4]
    h = hp[:, :hidden]                                                          # [N, H]
    pmat = hp[:, hidden:hidden + 2]                                              # [a_dst, 1]
    qmat = hp[:, hidden + 2:hidden + 4]                                          # [1, a_src]
    # TODO(synk): pad the h block to a 128-lane boundary so these slices are vreg-aligned (minor).

    # e[i,j] = a_dst[i] + a_src[j] via MXU (P @ Q^T); avoids [N,1]->[1,N] relayout.
    e = jax.lax.dot_general(pmat, qmat, (((1,), (1,)), ((), ())),
                            preferred_element_type=jnp.float32)                 # [N, N]
    e = jnp.where(e >= 0.0, e, 0.2 * e)                                          # LeakyReLU(0.2)

    # Dense adjacency from edge lists: two iota compares + one tiny MXU matmul.
    # adj[i, j] = 1 iff some edge has dst == i and src == j; padded slots hold -1 (never match).
    n = hp.shape[0]
    e_pad = dst_ref.shape[1]
    row_iota = jax.lax.broadcasted_iota(jnp.int32, (n, e_pad), 0)
    dst_oh_t = (row_iota == dst_ref[...]).astype(jnp.float32)                    # [N, E_pad]
    col_iota = jax.lax.broadcasted_iota(jnp.int32, (e_pad, n), 1)
    src_oh = (col_iota == src_ref[...]).astype(jnp.float32)                      # [E_pad, N]
    adj = jnp.dot(dst_oh_t, src_oh, preferred_element_type=jnp.float32) > 0.0    # bool [N, N]

    # Masked softmax over incoming edges (isolated / padded rows -> alpha = 0).
    masked = jnp.where(adj, e, -1e30)
    m = jnp.max(masked, axis=-1, keepdims=True)
    p = jnp.where(adj, jnp.exp(masked - m), 0.0)
    s = jnp.sum(p, axis=-1, keepdims=True)
    inv_s = pl.reciprocal(jnp.where(s > 0.0, s, 1.0), approx=True)               # EUP, not VALU divide
    alpha = p * inv_s

    emb = jnp.dot(alpha, h, preferred_element_type=jnp.float32)                  # [N, H] (bias added post-gather)

    # Self-node gather via vectorized one-hots; padded batch slots hold -1 -> zero row.
    b_pad = out_ref.shape[0]
    batch_iota = jax.lax.broadcasted_iota(jnp.int32, (b_pad, n), 1)
    oh_up = (batch_iota == up_self_ref[...]).astype(jnp.float32)                 # [B_pad, N]
    oh_down = (batch_iota == down_self_ref[...]).astype(jnp.float32)

    g_up = jnp.dot(oh_up, emb, preferred_element_type=jnp.float32) + up_b_ref[...]
    g_down = jnp.dot(oh_down, emb, preferred_element_type=jnp.float32) + down_b_ref[...]
    z = jax.nn.sigmoid(g_up) + jax.nn.sigmoid(g_down)                            # [B_pad, H]

    # mlp_w pre-padded to [H, 128] (col 0 = real weights) -> lane-dense unmasked store.
    out_ref[...] = jnp.dot(z, mlp_w_ref[...], preferred_element_type=jnp.float32) + mlp_b_ref[...]


# ----------------------------------------------------------------------------
# Host-side prep (block-diagonal merge of the two branches) + pallas_call
# ----------------------------------------------------------------------------
def _gat_weight_block(w, att_src, att_dst):
    """[F, H+4] = [W | W@att_dst^T | 0 | 0 | W@att_src^T]."""
    f = w.shape[0]
    return jnp.concatenate(
        [w, w @ att_dst.T, jnp.zeros((f, 2), jnp.float32), w @ att_src.T],
        axis=1).astype(jnp.float32)


def _build_merged_weight(params, hidden):
    up_blk = _gat_weight_block(params["up_w"], params["up_att_src"], params["up_att_dst"])
    dn_blk = _gat_weight_block(params["down_w"], params["down_att_src"], params["down_att_dst"])
    const_row = (jnp.zeros((1, hidden + 4), jnp.float32)
                 .at[0, hidden + 1].set(1.0)
                 .at[0, hidden + 2].set(1.0))
    return jnp.concatenate([up_blk, dn_blk, const_row], axis=0)                  # [2F+1, H+4]


def _build_merged_x(up_x, down_x, n_up_pad, n_down_pad, state_size):
    """Stacked node features; up rows use cols [0:F], down rows use cols [F:2F]; last col = 1."""
    n_up, n_down = up_x.shape[0], down_x.shape[0]
    x = jnp.zeros((n_up_pad + n_down_pad, 2 * state_size + 1), jnp.float32)
    x = x.at[:n_up, :state_size].set(up_x.astype(jnp.float32))
    x = x.at[:n_up, 2 * state_size].set(1.0)
    x = x.at[n_up_pad:n_up_pad + n_down, state_size:2 * state_size].set(down_x.astype(jnp.float32))
    x = x.at[n_up_pad:n_up_pad + n_down, 2 * state_size].set(1.0)
    return x


def _build_merged_edges(up_ei, down_ei, n_up_pad):
    src = jnp.concatenate([up_ei[0].astype(jnp.int32),
                           down_ei[0].astype(jnp.int32) + n_up_pad])
    dst = jnp.concatenate([up_ei[1].astype(jnp.int32),
                           down_ei[1].astype(jnp.int32) + n_up_pad])
    e = src.shape[0]
    e_pad = _round_up(max(e, 8), 8)
    fill = -jnp.ones((e_pad - e,), jnp.int32)
    src = jnp.concatenate([src, fill])
    dst = jnp.concatenate([dst, fill])
    return src.reshape(e_pad, 1), dst.reshape(1, e_pad)


def self_indices(nodes_per_graph):
    return jnp.cumsum(jnp.asarray(nodes_per_graph, jnp.int32)) - 1


def _pad_idx_col(idx, b_pad):
    idx = idx.astype(jnp.int32)
    idx = jnp.concatenate([idx, -jnp.ones((b_pad - idx.shape[0],), jnp.int32)])
    return idx.reshape(b_pad, 1)


def _fused_call(src_col, dst_row, up_self_col, down_self_col,
                x_blk, w_blk, up_bias, down_bias, mlp_w_pad, mlp_b_pad,
                *, hidden, b_pad):
    operands = (src_col, dst_row, up_self_col, down_self_col,
                x_blk, w_blk, up_bias, down_bias, mlp_w_pad, mlp_b_pad)

    def full(a):
        nd = a.ndim
        return pl.BlockSpec(tuple(a.shape), lambda i, _nd=nd: (0,) * _nd)

    kernel = functools.partial(_fused_event_critic_kernel, hidden=hidden)
    return pl.pallas_call(
        kernel,
        out_shape=jax.ShapeDtypeStruct((b_pad, 128), jnp.float32),
        grid=(1,),
        in_specs=[full(a) for a in operands],
        out_specs=pl.BlockSpec((b_pad, 128), lambda i: (0, 0)),
        compiler_params=pltpu.CompilerParams(dimension_semantics=("arbitrary",)),
    )(*operands)


def event_critic_forward(params, up_x, up_edge_index, up_nodes_per_graph,
                         down_x, down_edge_index, down_nodes_per_graph):
    state_size = up_x.shape[1]
    hidden = params["mlp_w"].shape[0]
    b = len(up_nodes_per_graph)
    b_pad = _round_up(max(b, 8), 8)

    n_up_pad = _round_up(max(up_x.shape[0], 8), 8)
    n_down_pad = _round_up(max(down_x.shape[0], 8), 8)

    x_blk = _build_merged_x(up_x, down_x, n_up_pad, n_down_pad, state_size)
    w_blk = _build_merged_weight(params, hidden)
    src_col, dst_row = _build_merged_edges(up_edge_index, down_edge_index, n_up_pad)
    up_self_col = _pad_idx_col(self_indices(up_nodes_per_graph), b_pad)
    down_self_col = _pad_idx_col(self_indices(down_nodes_per_graph) + n_up_pad, b_pad)

    # lane-dense final projection: pad [H,1] -> [H,128] (col 0 real), [1,1] -> [1,128]
    mlp_w_pad = jnp.zeros((hidden, 128), jnp.float32).at[:, :1].set(params["mlp_w"])
    mlp_b_pad = jnp.zeros((1, 128), jnp.float32).at[:, :1].set(params["mlp_b"])

    out_full = _fused_call(src_col, dst_row, up_self_col, down_self_col,
                           x_blk, w_blk,
                           params["up_bias"].astype(jnp.float32),
                           params["down_bias"].astype(jnp.float32),
                           mlp_w_pad, mlp_b_pad, hidden=hidden, b_pad=b_pad)
    return out_full[:b, :1]


# ----------------------------------------------------------------------------
# Pure-JAX reference (mirrors PyG GATConv semantics on the densified graph)
# ----------------------------------------------------------------------------
def _reference_forward(params, up_x, up_ei, up_npg, down_x, down_ei, down_npg):
    def gat(x, w, att_src, att_dst, bias, ei):
        n = x.shape[0]
        h = x.astype(jnp.float32) @ w
        a_src = jnp.sum(h * att_src, axis=-1, keepdims=True)
        a_dst = jnp.sum(h * att_dst, axis=-1, keepdims=True)
        adj = jnp.zeros((n, n), jnp.float32).at[ei[1], ei[0]].set(1.0)
        e = a_dst + a_src.reshape(1, -1)
        e = jnp.where(e >= 0, e, 0.2 * e)
        masked = jnp.where(adj > 0, e, -1e30)
        m = jnp.max(masked, axis=-1, keepdims=True)
        p = jnp.where(adj > 0, jnp.exp(masked - m), 0.0)
        s = jnp.sum(p, axis=-1, keepdims=True)
        alpha = p / jnp.where(s > 0, s, 1.0)
        return alpha @ h + bias

    up_o = gat(up_x, params["up_w"], params["up_att_src"], params["up_att_dst"],
               params["up_bias"], up_ei)
    down_o = gat(down_x, params["down_w"], params["down_att_src"], params["down_att_dst"],
                 params["down_bias"], down_ei)
    up_sel = up_o[self_indices(up_npg)]
    down_sel = down_o[self_indices(down_npg)]
    z = jax.nn.sigmoid(up_sel) + jax.nn.sigmoid(down_sel)
    return z @ params["mlp_w"] + params["mlp_b"]


# ----------------------------------------------------------------------------
# Deterministic example graphs (chain + edges into the per-graph "self" node)
# ----------------------------------------------------------------------------
def make_chain_graph_edges(nodes_per_graph):
    src, dst = [], []
    offset = 0
    for n in nodes_per_graph:
        last = offset + n - 1
        for k in range(n - 1):
            src.append(offset + k); dst.append(offset + k + 1)      # chain k -> k+1
            if k != n - 2:                                          # avoid duplicating (n-2 -> last)
                src.append(offset + k); dst.append(last)            # k -> self node
        offset += n
    return jnp.asarray(np.stack([src, dst]), jnp.int32)


if __name__ == "__main__":
    state_size, hidden_size = 8, 32
    up_nodes_per_graph = [5, 3]      # batch of 2 graphs, 8 nodes total
    down_nodes_per_graph = [4, 4]    # batch of 2 graphs, 8 nodes total
    n_up = sum(up_nodes_per_graph)
    n_down = sum(down_nodes_per_graph)

    key = jax.random.PRNGKey(0)
    ks = jax.random.split(key, 12)
    params = {
        "up_w":         0.2 * jax.random.normal(ks[0], (state_size, hidden_size), jnp.float32),
        "up_att_src":   0.2 * jax.random.normal(ks[1], (1, hidden_size), jnp.float32),
        "up_att_dst":   0.2 * jax.random.normal(ks[2], (1, hidden_size), jnp.float32),
        "up_bias":      0.1 * jax.random.normal(ks[3], (1, hidden_size), jnp.float32),
        "down_w":       0.2 * jax.random.normal(ks[4], (state_size, hidden_size), jnp.float32),
        "down_att_src": 0.2 * jax.random.normal(ks[5], (1, hidden_size), jnp.float32),
        "down_att_dst": 0.2 * jax.random.normal(ks[6], (1, hidden_size), jnp.float32),
        "down_bias":    0.1 * jax.random.normal(ks[7], (1, hidden_size), jnp.float32),
        "mlp_w":        0.2 * jax.random.normal(ks[8], (hidden_size, 1), jnp.float32),
        "mlp_b":        0.1 * jax.random.normal(ks[9], (1, 1), jnp.float32),
    }

    up_x = jax.random.normal(ks[10], (n_up, state_size), jnp.float32)
    down_x = jax.random.normal(ks[11], (n_down, state_size), jnp.float32)
    up_edge_index = make_chain_graph_edges(up_nodes_per_graph)
    down_edge_index = make_chain_graph_edges(down_nodes_per_graph)

    out = event_critic_forward(params, up_x, up_edge_index, up_nodes_per_graph,
                               down_x, down_edge_index, down_nodes_per_graph)
    out = jax.block_until_ready(out)
    assert out.shape == (2, 1) and out.dtype == jnp.float32

    ref = _reference_forward(params, up_x, up_edge_index, up_nodes_per_graph,
                             down_x, down_edge_index, down_nodes_per_graph)
    ref = jax.block_until_ready(ref)
    max_err = float(jnp.max(jnp.abs(out - ref)))
    assert max_err < 1e-2, f"mismatch vs reference: {max_err}"

    print("KERNEL_OK")
</pallas_src>

<mosaic_0001>
module attributes {stable_mosaic.version = 11 : i64} {
  func.func @_fused_event_critic_kernel(%arg0: i32, %arg1: memref<24x1xi32, #tpu.memory_space<vmem>>, %arg2: memref<1x24xi32, #tpu.memory_space<vmem>>, %arg3: memref<8x1xi32, #tpu.memory_space<vmem>>, %arg4: memref<8x1xi32, #tpu.memory_space<vmem>>, %arg5: memref<16x17xf32, #tpu.memory_space<vmem>>, %arg6: memref<17x36xf32, #tpu.memory_space<vmem>>, %arg7: memref<1x32xf32, #tpu.memory_space<vmem>>, %arg8: memref<1x32xf32, #tpu.memory_space<vmem>>, %arg9: memref<32x128xf32, #tpu.memory_space<vmem>>, %arg10: memref<1x128xf32, #tpu.memory_space<vmem>>, %arg11: memref<8x128xf32, #tpu.memory_space<vmem>>) attributes {dimension_semantics = [#tpu.dimension_semantics<arbitrary>], iteration_bounds = array<i64: 1>, scalar_prefetch = 0 : i64, scratch_operands = 0 : i64, tpu.core_type = #tpu.core_type<tc>, window_params = [{pipeline_mode = #tpu.pipeline_mode<synchronous>, transform_indices = @transform_0, window_bounds = array<i64: 24, 1>}, {pipeline_mode = #tpu.pipeline_mode<synchronous>, transform_indices = @transform_1, window_bounds = array<i64: 1, 24>}, {pipeline_mode = #tpu.pipeline_mode<synchronous>, transform_indices = @transform_2, window_bounds = array<i64: 8, 1>}, {pipeline_mode = #tpu.pipeline_mode<synchronous>, transform_indices = @transform_3, window_bounds = array<i64: 8, 1>}, {pipeline_mode = #tpu.pipeline_mode<synchronous>, transform_indices = @transform_4, window_bounds = array<i64: 16, 17>}, {pipeline_mode = #tpu.pipeline_mode<synchronous>, transform_indices = @transform_5, window_bounds = array<i64: 17, 36>}, {pipeline_mode = #tpu.pipeline_mode<synchronous>, transform_indices = @transform_6, window_bounds = array<i64: 1, 32>}, {pipeline_mode = #tpu.pipeline_mode<synchronous>, transform_indices = @transform_7, window_bounds = array<i64: 1, 32>}, {pipeline_mode = #tpu.pipeline_mode<synchronous>, transform_indices = @transform_8, window_bounds = array<i64: 32, 128>}, {pipeline_mode = #tpu.pipeline_mode<synchronous>, transform_indices = @transform_9, window_bounds = array<i64: 1, 128>}, {pipeline_mode = #tpu.pipeline_mode<synchronous>, transform_indices = @transform_10, window_bounds = array<i64: 8, 128>}]} {
    %c0 = arith.constant 0 : index
    %c0_0 = arith.constant 0 : index
    %0 = vector.load %arg5[%c0, %c0_0] : memref<16x17xf32, #tpu.memory_space<vmem>>, vector<16x17xf32>
    %c0_1 = arith.constant 0 : index
    %c0_2 = arith.constant 0 : index
    %1 = vector.load %arg6[%c0_1, %c0_2] : memref<17x36xf32, #tpu.memory_space<vmem>>, vector<17x36xf32>
    %cst = arith.constant dense<0.000000e+00> : vector<16x36xf32>
    %2 = tpu.matmul %0, %1, %cst {dimension_numbers = #tpu.dot_dimension_numbers<[1], [0], [0], [1], [0, 0, 1, 1], [], []>} : vector<16x17xf32>, vector<17x36xf32>, vector<16x36xf32> -> vector<16x36xf32>
    %3 = vector.extract_strided_slice %2 {offsets = [0, 0], sizes = [16, 32], strides = [1, 1]} : vector<16x36xf32> to vector<16x32xf32>
    %4 = vector.extract_strided_slice %2 {offsets = [0, 32], sizes = [16, 2], strides = [1, 1]} : vector<16x36xf32> to vector<16x2xf32>
    %5 = vector.extract_strided_slice %2 {offsets = [0, 34], sizes = [16, 2], strides = [1, 1]} : vector<16x36xf32> to vector<16x2xf32>
    %cst_3 = arith.constant dense<0.000000e+00> : vector<16x16xf32>
    %6 = tpu.matmul %4, %5, %cst_3 {dimension_numbers = #tpu.dot_dimension_numbers<[1], [1], [0], [0], [0, 0, 1, 0], [], []>} : vector<16x2xf32>, vector<16x2xf32>, vector<16x16xf32> -> vector<16x16xf32>
    %cst_4 = arith.constant 0.000000e+00 : f32
    %7 = vector.broadcast %cst_4 : f32 to vector<16x16xf32>
    %8 = arith.cmpf oge, %6, %7 : vector<16x16xf32>
    %cst_5 = arith.constant 2.000000e-01 : f32
    %9 = vector.broadcast %cst_5 : f32 to vector<16x16xf32>
    %10 = arith.mulf %9, %6 : vector<16x16xf32>
    %11 = arith.select %8, %6, %10 : vector<16x16xi1>, vector<16x16xf32>
    %12 = tpu.iota {dimensions = array<i32: 0>} : vector<16x24xi32>
    %c0_6 = arith.constant 0 : index
    %c0_7 = arith.constant 0 : index
    %13 = vector.load %arg2[%c0_6, %c0_7] : memref<1x24xi32, #tpu.memory_space<vmem>>, vector<1x24xi32>
    %14 = vector.broadcast %13 : vector<1x24xi32> to vector<16x24xi32>
    %15 = arith.cmpi eq, %12, %14 : vector<16x24xi32>
    %16 = arith.extui %15 : vector<16x24xi1> to vector<16x24xi32>
    %17 = arith.sitofp %16 : vector<16x24xi32> to vector<16x24xf32>
    %18 = tpu.iota {dimensions = array<i32: 1>} : vector<24x16xi32>
    %c0_8 = arith.constant 0 : index
    %c0_9 = arith.constant 0 : index
    %19 = vector.load %arg1[%c0_8, %c0_9] : memref<24x1xi32, #tpu.memory_space<vmem>>, vector<24x1xi32>
    %20 = vector.broadcast %19 : vector<24x1xi32> to vector<24x16xi32>
    %21 = arith.cmpi eq, %18, %20 : vector<24x16xi32>
    %22 = arith.extui %21 : vector<24x16xi1> to vector<24x16xi32>
    %23 = arith.sitofp %22 : vector<24x16xi32> to vector<24x16xf32>
    %cst_10 = arith.constant dense<0.000000e+00> : vector<16x16xf32>
    %24 = tpu.matmul %17, %23, %cst_10 {dimension_numbers = #tpu.dot_dimension_numbers<[1], [0], [0], [1], [0, 0, 1, 1], [], []>} : vector<16x24xf32>, vector<24x16xf32>, vector<16x16xf32> -> vector<16x16xf32>
    %cst_11 = arith.constant 0.000000e+00 : f32
    %25 = vector.broadcast %cst_11 : f32 to vector<16x16xf32>
    %26 = arith.cmpf ogt, %24, %25 : vector<16x16xf32>
    %cst_12 = arith.constant -1.000000e+30 : f32
    %27 = vector.broadcast %cst_12 : f32 to vector<16x16xf32>
    %28 = arith.select %26, %11, %27 : vector<16x16xi1>, vector<16x16xf32>
    %cst_13 = arith.constant dense<0xFF800000> : vector<16xf32>
    %29 = vector.multi_reduction <maximumf>, %28, %cst_13 [1] : vector<16x16xf32> to vector<16xf32>
    %30 = vector.shape_cast %29 : vector<16xf32> to vector<16x1xf32>
    %31 = vector.broadcast %30 : vector<16x1xf32> to vector<16x16xf32>
    %32 = arith.subf %28, %31 : vector<16x16xf32>
    %33 = math.exp %32 : vector<16x16xf32>
    %cst_14 = arith.constant 0.000000e+00 : f32
    %34 = vector.broadcast %cst_14 : f32 to vector<16x16xf32>
    %35 = arith.select %26, %33, %34 : vector<16x16xi1>, vector<16x16xf32>
    %cst_15 = arith.constant dense<0.000000e+00> : vector<16xf32>
    %36 = vector.multi_reduction <add>, %35, %cst_15 [1] : vector<16x16xf32> to vector<16xf32>
    %37 = vector.shape_cast %36 : vector<16xf32> to vector<16x1xf32>
    %cst_16 = arith.constant 0.000000e+00 : f32
    %38 = vector.broadcast %cst_16 : f32 to vector<16x1xf32>
    %39 = arith.cmpf ogt, %37, %38 : vector<16x1xf32>
    %cst_17 = arith.constant 1.000000e+00 : f32
    %40 = vector.broadcast %cst_17 : f32 to vector<16x1xf32>
    %41 = arith.select %39, %37, %40 : vector<16x1xi1>, vector<16x1xf32>
    %42 = tpu.reciprocal %41 {approx = true} : vector<16x1xf32> -> vector<16x1xf32>
    %43 = vector.broadcast %42 : vector<16x1xf32> to vector<16x16xf32>
    %44 = arith.mulf %35, %43 : vector<16x16xf32>
    %cst_18 = arith.constant dense<0.000000e+00> : vector<16x32xf32>
    %45 = tpu.matmul %44, %3, %cst_18 {dimension_numbers = #tpu.dot_dimension_numbers<[1], [0], [0], [1], [0, 0, 1, 1], [], []>} : vector<16x16xf32>, vector<16x32xf32>, vector<16x32xf32> -> vector<16x32xf32>
    %46 = tpu.iota {dimensions = array<i32: 1>} : vector<8x16xi32>
    %c0_19 = arith.constant 0 : index
    %c0_20 = arith.constant 0 : index
    %47 = vector.load %arg3[%c0_19, %c0_20] : memref<8x1xi32, #tpu.memory_space<vmem>>, vector<8x1xi32>
    %48 = vector.broadcast %47 : vector<8x1xi32> to vector<8x16xi32>
    %49 = arith.cmpi eq, %46, %48 : vector<8x16xi32>
    %50 = arith.extui %49 : vector<8x16xi1> to vector<8x16xi32>
    %51 = arith.sitofp %50 : vector<8x16xi32> to vector<8x16xf32>
    %c0_21 = arith.constant 0 : index
    %c0_22 = arith.constant 0 : index
    %52 = vector.load %arg4[%c0_21, %c0_22] : memref<8x1xi32, #tpu.memory_space<vmem>>, vector<8x1xi32>
    %53 = vector.broadcast %52 : vector<8x1xi32> to vector<8x16xi32>
    %54 = arith.cmpi eq, %46, %53 : vector<8x16xi32>
    %55 = arith.extui %54 : vector<8x16xi1> to vector<8x16xi32>
    %56 = arith.sitofp %55 : vector<8x16xi32> to vector<8x16xf32>
    %cst_23 = arith.constant dense<0.000000e+00> : vector<8x32xf32>
    %57 = tpu.matmul %51, %45, %cst_23 {dimension_numbers = #tpu.dot_dimension_numbers<[1], [0], [0], [1], [0, 0, 1, 1], [], []>} : vector<8x16xf32>, vector<16x32xf32>, vector<8x32xf32> -> vector<8x32xf32>
    %c0_24 = arith.constant 0 : index
    %c0_25 = arith.constant 0 : index
    %58 = vector.load %arg7[%c0_24, %c0_25] : memref<1x32xf32, #tpu.memory_space<vmem>>, vector<1x32xf32>
    %59 = vector.broadcast %58 : vector<1x32xf32> to vector<8x32xf32>
    %60 = arith.addf %57, %59 : vector<8x32xf32>
    %cst_26 = arith.constant dense<0.000000e+00> : vector<8x32xf32>
    %61 = tpu.matmul %56, %45, %cst_26 {dimension_numbers = #tpu.dot_dimension_numbers<[1], [0], [0], [1], [0, 0, 1, 1], [], []>} : vector<8x16xf32>, vector<16x32xf32>, vector<8x32xf32> -> vector<8x32xf32>
    %c0_27 = arith.constant 0 : index
    %c0_28 = arith.constant 0 : index
    %62 = vector.load %arg8[%c0_27, %c0_28] : memref<1x32xf32, #tpu.memory_space<vmem>>, vector<1x32xf32>
    %63 = vector.broadcast %62 : vector<1x32xf32> to vector<8x32xf32>
    %64 = arith.addf %61, %63 : vector<8x32xf32>
    %65 = arith.negf %60 : vector<8x32xf32>
    %66 = math.exp %65 : vector<8x32xf32>
    %cst_29 = arith.constant 1.000000e+00 : f32
    %67 = vector.broadcast %cst_29 : f32 to vector<8x32xf32>
    %68 = arith.addf %67, %66 : vector<8x32xf32>
    %69 = arith.divf %67, %68 : vector<8x32xf32>
    %70 = arith.negf %64 : vector<8x32xf32>
    %71 = math.exp %70 : vector<8x32xf32>
    %cst_30 = arith.constant 1.000000e+00 : f32
    %72 = vector.broadcast %cst_30 : f32 to vector<8x32xf32>
    %73 = arith.addf %72, %71 : vector<8x32xf32>
    %74 = arith.divf %72, %73 : vector<8x32xf32>
    %75 = arith.addf %69, %74 : vector<8x32xf32>
    %c0_31 = arith.constant 0 : index
    %c0_32 = arith.constant 0 : index
    %76 = vector.load %arg9[%c0_31, %c0_32] : memref<32x128xf32, #tpu.memory_space<vmem>>, vector<32x128xf32>
    %cst_33 = arith.constant dense<0.000000e+00> : vector<8x128xf32>
    %77 = tpu.matmul %75, %76, %cst_33 {dimension_numbers = #tpu.dot_dimension_numbers<[1], [0], [0], [1], [0, 0, 1, 1], [], []>} : vector<8x32xf32>, vector<32x128xf32>, vector<8x128xf32> -> vector<8x128xf32>
    %c0_34 = arith.constant 0 : index
    %c0_35 = arith.constant 0 : index
    %78 = vector.load %arg10[%c0_34, %c0_35] : memref<1x128xf32, #tpu.memory_space<vmem>>, vector<1x128xf32>
    %79 = vector.broadcast %78 : vector<1x128xf32> to vector<8x128xf32>
    %80 = arith.addf %77, %79 : vector<8x128xf32>
    %c0_36 = arith.constant 0 : index
    %c0_37 = arith.constant 0 : index
    %81 = vector.load %arg11[%c0_36, %c0_37] : memref<8x128xf32, #tpu.memory_space<vmem>>, vector<8x128xf32>
    tpu.vector_store %arg11[%c0_36, %c0_37], %80 {strides = array<i32>} : memref<8x128xf32, #tpu.memory_space<vmem>>, vector<8x128xf32>,
    return
  }
  func.func @transform_0(%arg0: i32) -> (i32, i32) {
    %c0_i32 = arith.constant 0 : i32
    %c0_i32_0 = arith.constant 0 : i32
    %c0_i32_1 = arith.constant 0 : i32
    return %c0_i32, %c0_i32_0 : i32, i32
  }
  func.func @transform_1(%arg0: i32) -> (i32, i32) {
    %c0_i32 = arith.constant 0 : i32
    %c0_i32_0 = arith.constant 0 : i32
    %c0_i32_1 = arith.constant 0 : i32
    return %c0_i32, %c0_i32_0 : i32, i32
  }
  func.func @transform_2(%arg0: i32) -> (i32, i32) {
    %c0_i32 = arith.constant 0 : i32
    %c0_i32_0 = arith.constant 0 : i32
    %c0_i32_1 = arith.constant 0 : i32
    return %c0_i32, %c0_i32_0 : i32, i32
  }
  func.func @transform_3(%arg0: i32) -> (i32, i32) {
    %c0_i32 = arith.constant 0 : i32
    %c0_i32_0 = arith.constant 0 : i32
    %c0_i32_1 = arith.constant 0 : i32
    return %c0_i32, %c0_i32_0 : i32, i32
  }
  func.func @transform_4(%arg0: i32) -> (i32, i32) {
    %c0_i32 = arith.constant 0 : i32
    %c0_i32_0 = arith.constant 0 : i32
    %c0_i32_1 = arith.constant 0 : i32
    return %c0_i32, %c0_i32_0 : i32, i32
  }
  func.func @transform_5(%arg0: i32) -> (i32, i32) {
    %c0_i32 = arith.constant 0 : i32
    %c0_i32_0 = arith.constant 0 : i32
    %c0_i32_1 = arith.constant 0 : i32
    return %c0_i32, %c0_i32_0 : i32, i32
  }
  func.func @transform_6(%arg0: i32) -> (i32, i32) {
    %c0_i32 = arith.constant 0 : i32
    %c0_i32_0 = arith.constant 0 : i32
    %c0_i32_1 = arith.constant 0 : i32
    return %c0_i32, %c0_i32_0 : i32, i32
  }
  func.func @transform_7(%arg0: i32) -> (i32, i32) {
    %c0_i32 = arith.constant 0 : i32
    %c0_i32_0 = arith.constant 0 : i32
    %c0_i32_1 = arith.constant 0 : i32
    return %c0_i32, %c0_i32_0 : i32, i32
  }
  func.func @transform_8(%arg0: i32) -> (i32, i32) {
    %c0_i32 = arith.constant 0 : i32
    %c0_i32_0 = arith.constant 0 : i32
    %c0_i32_1 = arith.constant 0 : i32
    return %c0_i32, %c0_i32_0 : i32, i32
  }
  func.func @transform_9(%arg0: i32) -> (i32, i32) {
    %c0_i32 = arith.constant 0 : i32
    %c0_i32_0 = arith.constant 0 : i32
    %c0_i32_1 = arith.constant 0 : i32
    return %c0_i32, %c0_i32_0 : i32, i32
  }
  func.func @transform_10(%arg0: i32) -> (i32, i32) {
    %c0_i32 = arith.constant 0 : i32
    %c0_i32_0 = arith.constant 0 : i32
    %c0_i32_1 = arith.constant 0 : i32
    return %c0_i32, %c0_i32_0 : i32, i32
  }
}

</mosaic_0001>

<llo_original>
// kernel: tpu_custom_call.1
$region0: #{tpu_custom_call.1}
  #allocation0 [shape = 'u32[]', space=smem, size = 0x4, offset = 0x4, fixed_abs, tag = 'smem constant byte address 0x4 - core index']
  #allocation1 [shape = 'u32[144,128]{1,0:T(1,128)}', space=vmem, size = 0x12000, scoped, tag = 'internal scratch']
  %s0 = inlined_call_operand.vmem [shape: s32[24,1], index: 0, kind: input, shape index: {}]
  %s1 = inlined_call_operand.vmem [shape: s32[1,24], index: 1, kind: input, shape index: {}]
  %s2 = inlined_call_operand.vmem [shape: s32[8,1], index: 2, kind: input, shape index: {}]
  %s3 = inlined_call_operand.vmem [shape: s32[8,1], index: 3, kind: input, shape index: {}]
  %s4 = inlined_call_operand.hbm [shape: f32[16,17], index: 4, kind: input, shape index: {}]
  %s5 = inlined_call_operand.vmem [shape: f32[17,36], index: 5, kind: input, shape index: {}]
  %s6 = inlined_call_operand.hbm [shape: f32[1,32], index: 6, kind: input, shape index: {}]
  %s7 = inlined_call_operand.hbm [shape: f32[1,32], index: 7, kind: input, shape index: {}]
  %s8 = inlined_call_operand.vmem [shape: f32[32,128], index: 8, kind: input, shape index: {}]
  %s9 = inlined_call_operand.vmem [shape: f32[1,128], index: 9, kind: input, shape index: {}]
  %s10 = inlined_call_operand.hbm [shape: f32[8,128], index: 10, kind: output, shape index: {}]
  %s11 = sld [smem:[#allocation0]]
  $region62: #{tpu_custom_call.1} parent=0
    _
  %s13 = ssub.s32 1, %s11
  %s14 = scalar_select 0, %s13, %s11
  $region1: #{tpu_custom_call.1} parent=0
    #allocation2 [shape = 'u8[8192]{0}', space=vmem, size = 0x2000, scoped, tag = 'input window, operand 4, single buffered']
    #allocation3 [shape = 's32[1]{0}', space=sflag, size = 0x4, scoped, tag = 'scoped memory for tpu_custom_call.1']
    #allocation4 [shape = 's32[1]{0}', space=sflag, size = 0x4, scoped, tag = 'scoped memory for tpu_custom_call.1']
    #allocation5 [shape = 'u8[512]{0}', space=vmem, size = 0x400, scoped, tag = 'input window, operand 6, single buffered']
    #allocation6 [shape = 's32[1]{0}', space=sflag, size = 0x4, scoped, tag = 'scoped memory for tpu_custom_call.1']
    #allocation7 [shape = 'u8[512]{0}', space=vmem, size = 0x400, scoped, tag = 'input window, operand 7, single buffered']
    #allocation8 [shape = 'u8[4096]{0}', space=vmem, size = 0x1000, scoped, tag = 'output window, operand 0, single buffered']
    %15 = vsyncpa [#allocation3], 0
    %16 = vsyncpa [#allocation6], 0
    %17 = vsyncpa [#allocation4], 0
    // Predicated region
    $region2: #{tpu_custom_call.1} parent=1 // pred_check
      _
    $region3: #{tpu_custom_call.1} parent=1 // pred_check_branch
      %19 = sbr.rel (0) target = $region5
    $region4: #{tpu_custom_call.1} parent=1 // pred_region
      _
    $region5: #{tpu_custom_call.1} parent=1 // pred_fallthru
      _
    // Predicated region
    $region6: #{tpu_custom_call.1} parent=1 // pred_check
      _
    $region7: #{tpu_custom_call.1} parent=1 // pred_check_branch
      %21 = sbr.rel (0) target = $region9
    $region8: #{tpu_custom_call.1} parent=1 // pred_region
      _
    $region9: #{tpu_custom_call.1} parent=1 // pred_fallthru
      _
    // Predicated region
    $region10: #{tpu_custom_call.1} parent=1 // pred_check
      _
    $region11: #{tpu_custom_call.1} parent=1 // pred_check_branch
      %23 = sbr.rel (0) target = $region13
    $region12: #{tpu_custom_call.1} parent=1 // pred_region
      _
    $region13: #{tpu_custom_call.1} parent=1 // pred_fallthru
      _
    // Predicated region
    $region14: #{tpu_custom_call.1} parent=1 // pred_check
      _
    $region15: #{tpu_custom_call.1} parent=1 // pred_check_branch
      %25 = sbr.rel (0) target = $region17
    $region16: #{tpu_custom_call.1} parent=1 // pred_region
      _
    $region17: #{tpu_custom_call.1} parent=1 // pred_fallthru
      _
    // Predicated region
    $region18: #{tpu_custom_call.1} parent=1 // pred_check
      _
    $region19: #{tpu_custom_call.1} parent=1 // pred_check_branch
      %27 = sbr.rel (0) target = $region21
    $region20: #{tpu_custom_call.1} parent=1 // pred_region
      %s29 = ssub.s32 256, 256
      %30 = vsyncadd [#allocation3], %s29
      %s31 = sshll.u32 [#allocation2], 4
      %s32 = int_to_ptr.vmem [resolvable:$true] %s31
      %37 = dma.hbm_to_vmem [thread:$0]  %s4, 256, %s32, [#allocation3], 128, 128, 8
    $region21: #{tpu_custom_call.1} parent=1 // pred_fallthru
      _
    // Predicated region
    $region22: #{tpu_custom_call.1} parent=1 // pred_check
      _
    $region23: #{tpu_custom_call.1} parent=1 // pred_check_branch
      %39 = sbr.rel (0) target = $region25
    $region24: #{tpu_custom_call.1} parent=1 // pred_region
      _
    $region25: #{tpu_custom_call.1} parent=1 // pred_fallthru
      _
    // Predicated region
    $region26: #{tpu_custom_call.1} parent=1 // pred_check
      _
    $region27: #{tpu_custom_call.1} parent=1 // pred_check_branch
      %41 = sbr.rel (0) target = $region29
    $region28: #{tpu_custom_call.1} parent=1 // pred_region
      %s43 = ssub.s32 16, 16
      %44 = vsyncadd [#allocation6], %s43
      %s46 = sshll.u32 [#allocation5], 4
      %s47 = int_to_ptr.vmem [resolvable:$true] %s46
      %49 = dma.hbm_to_vmem [thread:$0]  %s6, 16, %s47, [#allocation6]
    $region29: #{tpu_custom_call.1} parent=1 // pred_fallthru
      _
    // Predicated region
    $region30: #{tpu_custom_call.1} parent=1 // pred_check
      _
    $region31: #{tpu_custom_call.1} parent=1 // pred_check_branch
      %51 = sbr.rel (0) target = $region33
    $region32: #{tpu_custom_call.1} parent=1 // pred_region
      %s53 = ssub.s32 16, 16
      %54 = vsyncadd [#allocation6], %s53
      %s56 = sshll.u32 [#allocation7], 4
      %s57 = int_to_ptr.vmem [resolvable:$true] %s56
      %59 = dma.hbm_to_vmem [thread:$0]  %s7, 16, %s57, [#allocation6]
    $region33: #{tpu_custom_call.1} parent=1 // pred_fallthru
      _
    // Predicated region
    $region34: #{tpu_custom_call.1} parent=1 // pred_check
      _
    $region35: #{tpu_custom_call.1} parent=1 // pred_check_branch
      %61 = sbr.rel (0) target = $region37
    $region36: #{tpu_custom_call.1} parent=1 // pred_region
      _
    $region37: #{tpu_custom_call.1} parent=1 // pred_fallthru
      _
    // Predicated region
    $region38: #{tpu_custom_call.1} parent=1 // pred_check
      _
    $region39: #{tpu_custom_call.1} parent=1 // pred_check_branch
      %63 = sbr.rel (0) target = $region41
    $region40: #{tpu_custom_call.1} parent=1 // pred_region
      _
    $region41: #{tpu_custom_call.1} parent=1 // pred_fallthru
      _
    // Predicated region
    $region42: #{tpu_custom_call.1} parent=1 // pred_check
      _
    $region43: #{tpu_custom_call.1} parent=1 // pred_check_branch
      %65 = sbr.rel (0) target = $region45
    $region44: #{tpu_custom_call.1} parent=1 // pred_region
      %66 = dma.done [#allocation3], 256
    $region45: #{tpu_custom_call.1} parent=1 // pred_fallthru
      _
    // Predicated region
    $region46: #{tpu_custom_call.1} parent=1 // pred_check
      _
    $region47: #{tpu_custom_call.1} parent=1 // pred_check_branch
      %68 = sbr.rel (0) target = $region49
    $region48: #{tpu_custom_call.1} parent=1 // pred_region
      %69 = dma.done [#allocation6], 16
    $region49: #{tpu_custom_call.1} parent=1 // pred_fallthru
      _
    // Predicated region
    $region50: #{tpu_custom_call.1} parent=1 // pred_check
      _
    $region51: #{tpu_custom_call.1} parent=1 // pred_check_branch
      %71 = sbr.rel (0) target = $region53
    $region52: #{tpu_custom_call.1} parent=1 // pred_region
      %72 = dma.done [#allocation6], 16
    $region53: #{tpu_custom_call.1} parent=1 // pred_fallthru
      _
    %v73 = vld [vmem:[#allocation2] sm:$0xff]
    %v74 = vld [vmem:[#allocation2 + $0x8] sm:$0xff]
    %v75 = vld [vmem:[%s5] sm:$0xff]
    %v76 = vld [vmem:[%s5 + $0x8] sm:$0xff]
    %v77 = vld [vmem:[%s5 + $0x10] sm:$0x1]
    %vm78 = vcmask 138240
    %v80 = vsel %vm78, %v73, 0
    %v83 = vsel %vm78, %v74, 0
    %vm85 = vcmask 1040384
    %v87 = vsel %vm85, %v77, 0
    %89 = vmatprep.subr.mxu0 0.0
    %90 = vmatpush1.msra.mxu0 0.0
    %91 = vmatprep.subr.mxu0 0.0
    %92 = vmatpush1.msra.mxu0 0.0
    %93 = vmatprep.subr.mxu0 0.0
    %94 = vmatpush1.msra.mxu0 0.0
    %95 = vmatprep.subr.mxu0 0.0
    %96 = vmatpush1.msra.mxu0 0.0
    %97 = vmatprep.subr.mxu0 0.0
    %98 = vmatpush1.msra.mxu0 0.0
    %99 = vmatprep.subr.mxu0 0.0
    %100 = vmatpush1.msra.mxu0 0.0
    %101 = vmatprep.subr.mxu0 0.0
    %102 = vmatpush1.msra.mxu0 0.0
    %103 = vmatprep.subr.mxu0 0.0
    %104 = vmatpush1.msra.mxu0 0.0
    %105 = vmatprep.subr.mxu0 0.0
    %106 = vmatpush1.msra.mxu0 0.0
    %107 = vmatprep.subr.mxu0 0.0
    %108 = vmatpush1.msra.mxu0 0.0
    %109 = vmatprep.subr.mxu0 0.0
    %110 = vmatpush1.msra.mxu0 0.0
    %111 = vmatprep.subr.mxu0 0.0
    %112 = vmatpush1.msra.mxu0 0.0
    %113 = vmatprep.subr.mxu0 0.0
    %114 = vmatpush1.msra.mxu0 0.0
    %115 = vmatprep.subr.mxu0 0.0
    %116 = vmatpush1.msra.mxu0 %v87
    %117 = vmatprep.subr.mxu0 0.0
    %118 = vmatpush1.msra.mxu0 %v76
    %119 = vmatprep.subr.mxu0 0.0
    %120 = vmatpush1.msra.mxu0 %v75
    %121 = vmatprep.subr.mxu0 0.0
    %122 = vmatpush2.msra.mxu0 0.0
    %123 = vmatprep.subr.mxu0 0.0
    %124 = vmatpush2.msra.mxu0 0.0
    %125 = vmatprep.subr.mxu0 0.0
    %126 = vmatpush2.msra.mxu0 0.0
    %127 = vmatprep.subr.mxu0 0.0
    %128 = vmatpush2.msra.mxu0 0.0
    %129 = vmatprep.subr.mxu0 0.0
    %130 = vmatpush2.msra.mxu0 0.0
    %131 = vmatprep.subr.mxu0 0.0
    %132 = vmatpush2.msra.mxu0 0.0
    %133 = vmatprep.subr.mxu0 0.0
    %134 = vmatpush2.msra.mxu0 0.0
    %135 = vmatprep.subr.mxu0 0.0
    %136 = vmatpush2.msra.mxu0 0.0
    %137 = vmatprep.subr.mxu0 0.0
    %138 = vmatpush2.msra.mxu0 0.0
    %139 = vmatprep.subr.mxu0 0.0
    %140 = vmatpush2.msra.mxu0 0.0
    %141 = vmatprep.subr.mxu0 0.0
    %142 = vmatpush2.msra.mxu0 0.0
    %143 = vmatprep.subr.mxu0 0.0
    %144 = vmatpush2.msra.mxu0 0.0
    %145 = vmatprep.subr.mxu0 0.0
    %146 = vmatpush2.msra.mxu0 0.0
    %147 = vmatprep.subr.mxu0 0.0
    %148 = vmatpush2.msra.mxu0 0.0
    %149 = vmatprep.subr.mxu0 0.0
    %150 = vmatpush2.msra.mxu0 0.0
    %151 = vmatprep.subr.mxu0 0.0
    %152 = vmatpush2.msra.mxu0 0.0
    %153 = vmatprep.mubr.f32.mxu0 0.0
    %154 = vmatmul.mubr.f32.gmra.mxu0 %v80
    %v155 = vpop.f32.mrf.mxu0
    %v156 = vadd.f32 0.0, %v155
    %v157 = vpop.f32.mrf.mxu0
    %158 = vmatprep.mubr.f32.mxu0 0.0
    %159 = vmatmul.mubr.f32.gmra.mxu0 %v83
    %v160 = vpop.f32.mrf.mxu0
    %v161 = vadd.f32 0.0, %v160
    %v162 = vpop.f32.mrf.mxu0
    %163 = vdwg.mxu0
    %166 = vrot.lane.b32.xlu0 %v156, 96
    %v167 = vpop.permute.xlu0 %166
    %168 = vrot.lane.b32.xlu0 %v161, 96
    %v169 = vpop.permute.xlu0 %168
    %170 = vrot.lane.b32.xlu0 %v156, 94
    %v171 = vpop.permute.xlu0 %170
    %172 = vrot.lane.b32.xlu0 %v161, 94
    %v173 = vpop.permute.xlu0 %172
    %vm174 = vcmask 15360
    %v175 = vsel %vm174, %v167, 0
    %v177 = vsel %vm174, %v169, 0
    %v179 = vsel %vm174, %v171, 0
    %v181 = vsel %vm174, %v173, 0
    %183 = vmatprep.subr.mxu0 0.0
    %184 = vmatpush1.xpose.msra.mxu0 0.0
    %185 = vmatprep.subr.mxu0 0.0
    %186 = vmatpush1.xpose.msra.mxu0 0.0
    %187 = vmatprep.subr.mxu0 0.0
    %188 = vmatpush1.xpose.msra.mxu0 0.0
    %189 = vmatprep.subr.mxu0 0.0
    %190 = vmatpush1.xpose.msra.mxu0 0.0
    %191 = vmatprep.subr.mxu0 0.0
    %192 = vmatpush1.xpose.msra.mxu0 0.0
    %193 = vmatprep.subr.mxu0 0.0
    %194 = vmatpush1.xpose.msra.mxu0 0.0
    %195 = vmatprep.subr.mxu0 0.0
    %196 = vmatpush1.xpose.msra.mxu0 0.0
    %197 = vmatprep.subr.mxu0 0.0
    %198 = vmatpush1.xpose.msra.mxu0 0.0
    %199 = vmatprep.subr.mxu0 0.0
    %200 = vmatpush1.xpose.msra.mxu0 0.0
    %201 = vmatprep.subr.mxu0 0.0
    %202 = vmatpush1.xpose.msra.mxu0 0.0
    %203 = vmatprep.subr.mxu0 0.0
    %204 = vmatpush1.xpose.msra.mxu0 0.0
    %205 = vmatprep.subr.mxu0 0.0
    %206 = vmatpush1.xpose.msra.mxu0 0.0
    %207 = vmatprep.subr.mxu0 0.0
    %208 = vmatpush1.xpose.msra.mxu0 0.0
    %209 = vmatprep.subr.mxu0 0.0
    %210 = vmatpush1.xpose.msra.mxu0 0.0
    %211 = vmatprep.subr.mxu0 0.0
    %212 = vmatpush1.xpose.msra.mxu0 %v181
    %213 = vmatprep.subr.mxu0 0.0
    %214 = vmatpush1.xpose.msra.mxu0 %v179
    %215 = vmatprep.subr.mxu0 0.0
    %216 = vmatpush2.xpose.msra.mxu0 0.0
    %217 = vmatprep.subr.mxu0 0.0
    %218 = vmatpush2.xpose.msra.mxu0 0.0
    %219 = vmatprep.subr.mxu0 0.0
    %220 = vmatpush2.xpose.msra.mxu0 0.0
    %221 = vmatprep.subr.mxu0 0.0
    %222 = vmatpush2.xpose.msra.mxu0 0.0
    %223 = vmatprep.subr.mxu0 0.0
    %224 = vmatpush2.xpose.msra.mxu0 0.0
    %225 = vmatprep.subr.mxu0 0.0
    %226 = vmatpush2.xpose.msra.mxu0 0.0
    %227 = vmatprep.subr.mxu0 0.0
    %228 = vmatpush2.xpose.msra.mxu0 0.0
    %229 = vmatprep.subr.mxu0 0.0
    %230 = vmatpush2.xpose.msra.mxu0 0.0
    %231 = vmatprep.subr.mxu0 0.0
    %232 = vmatpush2.xpose.msra.mxu0 0.0
    %233 = vmatprep.subr.mxu0 0.0
    %234 = vmatpush2.xpose.msra.mxu0 0.0
    %235 = vmatprep.subr.mxu0 0.0
    %236 = vmatpush2.xpose.msra.mxu0 0.0
    %237 = vmatprep.subr.mxu0 0.0
    %238 = vmatpush2.xpose.msra.mxu0 0.0
    %239 = vmatprep.subr.mxu0 0.0
    %240 = vmatpush2.xpose.msra.mxu0 0.0
    %241 = vmatprep.subr.mxu0 0.0
    %242 = vmatpush2.xpose.msra.mxu0 0.0
    %243 = vmatprep.subr.mxu0 0.0
    %244 = vmatpush2.xpose.msra.mxu0 0.0
    %245 = vmatprep.subr.mxu0 0.0
    %246 = vmatpush2.xpose.msra.mxu0 0.0
    %247 = vmatprep.mubr.f32.mxu0 0.0
    %248 = vmatmul.mubr.f32.gmra.mxu0 %v175
    %v249 = vpop.f32.mrf.mxu0
    %v250 = vadd.f32 0.0, %v249
    %v251 = vpop.f32.mrf.mxu0
    %252 = vmatprep.mubr.f32.mxu0 0.0
    %253 = vmatmul.mubr.f32.gmra.mxu0 %v177
    %v254 = vpop.f32.mrf.mxu0
    %v255 = vadd.f32 0.0, %v254
    %v256 = vpop.f32.mrf.mxu0
    %257 = vdwg.mxu0
    %vm258 = vcmp.ge.f32.partialorder %v250, 0.0
    %vm259 = vcmp.ge.f32.partialorder %v255, 0.0
    %v260 = vmul.f32 %v250, 0.2
    %v261 = vmul.f32 %v255, 0.2
    %v262 = vsel %vm258, %v250, %v260
    %v263 = vsel %vm259, %v255, %v261
    %v264 = vlaneseq
    %v265 = vshrl.u32 %v264, 7
    %v266 = vadd.s32 %v265, 8
    %v267 = vld [vmem:[%s1] sm:$0x1]
    %v268 = vlaneseq
    %v269 = vshrl.u32 %v268, 7
    %v270 = vsub.s32 0, %v269
    %v271 = vrot.slane %v267, %v270
    %vm272 = vcmp.eq.s32.totalorder %v265, %v271
    %vm273 = vcmp.eq.s32.totalorder %v266, %v271
    %v274 = vsel %vm272, 1, 0
    %v275 = vsel %vm273, 1, 0
    %v276 = vcvt.s32.f32 %v274
    %v277 = vcvt.s32.f32 %v275
    %v278 = vlaneseq
    %v279 = vand.u32 %v278, 127
    %v280 = vld [vmem:[%s0] sm:$0xff]
    %v281 = vld [vmem:[%s0 + $0x8] sm:$0xff]
    %v282 = vld [vmem:[%s0 + $0x10] sm:$0xff]
    %283 = vset.pattern.permute.xlu0 0
    %284 = vperm.xlu0 %283, %v280
    %v285 = vpop.permute.xlu0 %284
    %286 = vset.pattern.permute.xlu0 0
    %287 = vperm.xlu0 %286, %v281
    %v288 = vpop.permute.xlu0 %287
    %289 = vset.pattern.permute.xlu0 0
    %290 = vperm.xlu0 %289, %v282
    %v291 = vpop.permute.xlu0 %290
    %vm292 = vcmp.eq.s32.totalorder %v279, %v285
    %vm293 = vcmp.eq.s32.totalorder %v279, %v288
    %vm294 = vcmp.eq.s32.totalorder %v279, %v291
    %v295 = vsel %vm292, 1, 0
    %v296 = vsel %vm293, 1, 0
    %v297 = vsel %vm294, 1, 0
    %v298 = vcvt.s32.f32 %v295
    %v299 = vcvt.s32.f32 %v296
    %v300 = vcvt.s32.f32 %v297
    %vm301 = vcmask 195584
    %v303 = vsel %vm301, %v276, 0
    %v306 = vsel %vm301, %v277, 0
    %308 = vmatprep.subr.mxu0 0.0
    %309 = vmatpush1.msra.mxu0 0.0
    %310 = vmatprep.subr.mxu0 0.0
    %311 = vmatpush1.msra.mxu0 0.0
    %312 = vmatprep.subr.mxu0 0.0
    %313 = vmatpush1.msra.mxu0 0.0
    %314 = vmatprep.subr.mxu0 0.0
    %315 = vmatpush1.msra.mxu0 0.0
    %316 = vmatprep.subr.mxu0 0.0
    %317 = vmatpush1.msra.mxu0 0.0
    %318 = vmatprep.subr.mxu0 0.0
    %319 = vmatpush1.msra.mxu0 0.0
    %320 = vmatprep.subr.mxu0 0.0
    %321 = vmatpush1.msra.mxu0 0.0
    %322 = vmatprep.subr.mxu0 0.0
    %323 = vmatpush1.msra.mxu0 0.0
    %324 = vmatprep.subr.mxu0 0.0
    %325 = vmatpush1.msra.mxu0 0.0
    %326 = vmatprep.subr.mxu0 0.0
    %327 = vmatpush1.msra.mxu0 0.0
    %328 = vmatprep.subr.mxu0 0.0
    %329 = vmatpush1.msra.mxu0 0.0
    %330 = vmatprep.subr.mxu0 0.0
    %331 = vmatpush1.msra.mxu0 0.0
    %332 = vmatprep.subr.mxu0 0.0
    %333 = vmatpush1.msra.mxu0 0.0
    %334 = vmatprep.subr.mxu0 0.0
    %335 = vmatpush1.msra.mxu0 %v300
    %336 = vmatprep.subr.mxu0 0.0
    %337 = vmatpush1.msra.mxu0 %v299
    %338 = vmatprep.subr.mxu0 0.0
    %339 = vmatpush1.msra.mxu0 %v298
    %340 = vmatprep.subr.mxu0 0.0
    %341 = vmatpush2.msra.mxu0 0.0
    %342 = vmatprep.subr.mxu0 0.0
    %343 = vmatpush2.msra.mxu0 0.0
    %344 = vmatprep.subr.mxu0 0.0
    %345 = vmatpush2.msra.mxu0 0.0
    %346 = vmatprep.subr.mxu0 0.0
    %347 = vmatpush2.msra.mxu0 0.0
    %348 = vmatprep.subr.mxu0 0.0
    %349 = vmatpush2.msra.mxu0 0.0
    %350 = vmatprep.subr.mxu0 0.0
    %351 = vmatpush2.msra.mxu0 0.0
    %352 = vmatprep.subr.mxu0 0.0
    %353 = vmatpush2.msra.mxu0 0.0
    %354 = vmatprep.subr.mxu0 0.0
    %355 = vmatpush2.msra.mxu0 0.0
    %356 = vmatprep.subr.mxu0 0.0
    %357 = vmatpush2.msra.mxu0 0.0
    %358 = vmatprep.subr.mxu0 0.0
    %359 = vmatpush2.msra.mxu0 0.0
    %360 = vmatprep.subr.mxu0 0.0
    %361 = vmatpush2.msra.mxu0 0.0
    %362 = vmatprep.subr.mxu0 0.0
    %363 = vmatpush2.msra.mxu0 0.0
    %364 = vmatprep.subr.mxu0 0.0
    %365 = vmatpush2.msra.mxu0 0.0
    %366 = vmatprep.subr.mxu0 0.0
    %367 = vmatpush2.msra.mxu0 0.0
    %368 = vmatprep.subr.mxu0 0.0
    %369 = vmatpush2.msra.mxu0 0.0
    %370 = vmatprep.subr.mxu0 0.0
    %371 = vmatpush2.msra.mxu0 0.0
    %372 = vmatprep.mubr.f32.mxu0 0.0
    %373 = vmatmul.mubr.f32.gmra.mxu0 %v303
    %v374 = vpop.f32.mrf.mxu0
    %v375 = vadd.f32 0.0, %v374
    %v376 = vpop.f32.mrf.mxu0
    %377 = vmatprep.mubr.f32.mxu0 0.0
    %378 = vmatmul.mubr.f32.gmra.mxu0 %v306
    %v379 = vpop.f32.mrf.mxu0
    %v380 = vadd.f32 0.0, %v379
    %v381 = vpop.f32.mrf.mxu0
    %382 = vdwg.mxu0
    %vm383 = vcmp.gt.f32.partialorder %v375, 0.0
    %vm384 = vcmp.gt.f32.partialorder %v380, 0.0
    %v385 = vsel %vm383, %v262, -1e+30
    %v386 = vsel %vm384, %v263, -1e+30
    %vm387 = vcmask 130048
    %v388 = vsel %vm387, %v385, -inf
    %389 = vmax.xlane.f32.xlu0 %v388
    %v390 = vpop.xlane.xlu0 %389
    %v391 = vsel %vm387, %v386, -inf
    %392 = vmax.xlane.f32.xlu0 %v391
    %v393 = vpop.xlane.xlu0 %392
    %v394 = vsub.f32 %v385, %v390
    %v395 = vsub.f32 %v386, %v393
    %v396 = vmul.f32 %v394, 1.442695
    %v397 = vpow.pop %v396
    %v398 = vmul.f32 %v395, 1.442695
    %v399 = vpow.pop %v398
    %v400 = vsel %vm383, %v397, 0.0
    %v401 = vsel %vm384, %v399, 0.0
    %v402 = vsel %vm387, %v400, 0.0
    %403 = vadd.xlane.f32.xlu0 %v402
    %v404 = vpop.xlane.xlu0 %403
    %v405 = vsel %vm387, %v401, 0.0
    %406 = vadd.xlane.f32.xlu0 %v405
    %v407 = vpop.xlane.xlu0 %406
    %vm408 = vcmp.gt.f32.partialorder %v404, 0.0
    %vm409 = vcmp.gt.f32.partialorder %v407, 0.0
    %v410 = vsel %vm408, %v404, 1.0
    %v411 = vsel %vm409, %v407, 1.0
    %v412 = vrcp.pop %v410
    %v413 = vrcp.pop %v411
    %v414 = vmul.f32 %v400, %v412
    %v415 = vmul.f32 %v401, %v413
    %v417 = vsel %vm387, %v414, 0
    %v420 = vsel %vm387, %v415, 0
    %422 = vmatprep.subr.mxu0 0.0
    %423 = vmatpush1.msra.mxu0 0.0
    %424 = vmatprep.subr.mxu0 0.0
    %425 = vmatpush1.msra.mxu0 0.0
    %426 = vmatprep.subr.mxu0 0.0
    %427 = vmatpush1.msra.mxu0 0.0
    %428 = vmatprep.subr.mxu0 0.0
    %429 = vmatpush1.msra.mxu0 0.0
    %430 = vmatprep.subr.mxu0 0.0
    %431 = vmatpush1.msra.mxu0 0.0
    %432 = vmatprep.subr.mxu0 0.0
    %433 = vmatpush1.msra.mxu0 0.0
    %434 = vmatprep.subr.mxu0 0.0
    %435 = vmatpush1.msra.mxu0 0.0
    %436 = vmatprep.subr.mxu0 0.0
    %437 = vmatpush1.msra.mxu0 0.0
    %438 = vmatprep.subr.mxu0 0.0
    %439 = vmatpush1.msra.mxu0 0.0
    %440 = vmatprep.subr.mxu0 0.0
    %441 = vmatpush1.msra.mxu0 0.0
    %442 = vmatprep.subr.mxu0 0.0
    %443 = vmatpush1.msra.mxu0 0.0
    %444 = vmatprep.subr.mxu0 0.0
    %445 = vmatpush1.msra.mxu0 0.0
    %446 = vmatprep.subr.mxu0 0.0
    %447 = vmatpush1.msra.mxu0 0.0
    %448 = vmatprep.subr.mxu0 0.0
    %449 = vmatpush1.msra.mxu0 0.0
    %450 = vmatprep.subr.mxu0 0.0
    %451 = vmatpush1.msra.mxu0 %v161
    %452 = vmatprep.subr.mxu0 0.0
    %453 = vmatpush1.msra.mxu0 %v156
    %454 = vmatprep.subr.mxu0 0.0
    %455 = vmatpush2.msra.mxu0 0.0
    %456 = vmatprep.subr.mxu0 0.0
    %457 = vmatpush2.msra.mxu0 0.0
    %458 = vmatprep.subr.mxu0 0.0
    %459 = vmatpush2.msra.mxu0 0.0
    %460 = vmatprep.subr.mxu0 0.0
    %461 = vmatpush2.msra.mxu0 0.0
    %462 = vmatprep.subr.mxu0 0.0
    %463 = vmatpush2.msra.mxu0 0.0
    %464 = vmatprep.subr.mxu0 0.0
    %465 = vmatpush2.msra.mxu0 0.0
    %466 = vmatprep.subr.mxu0 0.0
    %467 = vmatpush2.msra.mxu0 0.0
    %468 = vmatprep.subr.mxu0 0.0
    %469 = vmatpush2.msra.mxu0 0.0
    %470 = vmatprep.subr.mxu0 0.0
    %471 = vmatpush2.msra.mxu0 0.0
    %472 = vmatprep.subr.mxu0 0.0
    %473 = vmatpush2.msra.mxu0 0.0
    %474 = vmatprep.subr.mxu0 0.0
    %475 = vmatpush2.msra.mxu0 0.0
    %476 = vmatprep.subr.mxu0 0.0
    %477 = vmatpush2.msra.mxu0 0.0
    %478 = vmatprep.subr.mxu0 0.0
    %479 = vmatpush2.msra.mxu0 0.0
    %480 = vmatprep.subr.mxu0 0.0
    %481 = vmatpush2.msra.mxu0 0.0
    %482 = vmatprep.subr.mxu0 0.0
    %483 = vmatpush2.msra.mxu0 0.0
    %484 = vmatprep.subr.mxu0 0.0
    %485 = vmatpush2.msra.mxu0 0.0
    %486 = vmatprep.mubr.f32.mxu0 0.0
    %487 = vmatmul.mubr.f32.gmra.mxu0 %v417
    %v488 = vpop.f32.mrf.mxu0
    %v489 = vadd.f32 0.0, %v488
    %v490 = vpop.f32.mrf.mxu0
    %491 = vmatprep.mubr.f32.mxu0 0.0
    %492 = vmatmul.mubr.f32.gmra.mxu0 %v420
    %v493 = vpop.f32.mrf.mxu0
    %v494 = vadd.f32 0.0, %v493
    %v495 = vpop.f32.mrf.mxu0
    %496 = vdwg.mxu0
    %v497 = vld [vmem:[%s2] sm:$0xff]
    %498 = vset.pattern.permute.xlu0 0
    %499 = vperm.xlu0 %498, %v497
    %v500 = vpop.permute.xlu0 %499
    %vm501 = vcmp.eq.s32.totalorder %v279, %v500
    %v502 = vsel %vm501, 1, 0
    %v503 = vcvt.s32.f32 %v502
    %v504 = vld [vmem:[%s3] sm:$0xff]
    %505 = vset.pattern.permute.xlu0 0
    %506 = vperm.xlu0 %505, %v504
    %v507 = vpop.permute.xlu0 %506
    %vm508 = vcmp.eq.s32.totalorder %v279, %v507
    %v509 = vsel %vm508, 1, 0
    %v510 = vcvt.s32.f32 %v509
    %v511 = vld [vmem:[#allocation5] sm:$0x1]
    %v513 = vlaneseq
    %v514 = vshrl.u32 %v513, 7
    %v515 = vsub.s32 0, %v514
    %v516 = vrot.slane %v511, %v515
    %v519 = vsel %vm387, %v503, 0
    %521 = vmatprep.subr.mxu0 0.0
    %522 = vmatpush1.msra.mxu0 0.0
    %523 = vmatprep.subr.mxu0 0.0
    %524 = vmatpush1.msra.mxu0 0.0
    %525 = vmatprep.subr.mxu0 0.0
    %526 = vmatpush1.msra.mxu0 0.0
    %527 = vmatprep.subr.mxu0 0.0
    %528 = vmatpush1.msra.mxu0 0.0
    %529 = vmatprep.subr.mxu0 0.0
    %530 = vmatpush1.msra.mxu0 0.0
    %531 = vmatprep.subr.mxu0 0.0
    %532 = vmatpush1.msra.mxu0 0.0
    %533 = vmatprep.subr.mxu0 0.0
    %534 = vmatpush1.msra.mxu0 0.0
    %535 = vmatprep.subr.mxu0 0.0
    %536 = vmatpush1.msra.mxu0 0.0
    %537 = vmatprep.subr.mxu0 0.0
    %538 = vmatpush1.msra.mxu0 0.0
    %539 = vmatprep.subr.mxu0 0.0
    %540 = vmatpush1.msra.mxu0 0.0
    %541 = vmatprep.subr.mxu0 0.0
    %542 = vmatpush1.msra.mxu0 0.0
    %543 = vmatprep.subr.mxu0 0.0
    %544 = vmatpush1.msra.mxu0 0.0
    %545 = vmatprep.subr.mxu0 0.0
    %546 = vmatpush1.msra.mxu0 0.0
    %547 = vmatprep.subr.mxu0 0.0
    %548 = vmatpush1.msra.mxu0 0.0
    %549 = vmatprep.subr.mxu0 0.0
    %550 = vmatpush1.msra.mxu0 %v494
    %551 = vmatprep.subr.mxu0 0.0
    %552 = vmatpush1.msra.mxu0 %v489
    %553 = vmatprep.subr.mxu0 0.0
    %554 = vmatpush2.msra.mxu0 0.0
    %555 = vmatprep.subr.mxu0 0.0
    %556 = vmatpush2.msra.mxu0 0.0
    %557 = vmatprep.subr.mxu0 0.0
    %558 = vmatpush2.msra.mxu0 0.0
    %559 = vmatprep.subr.mxu0 0.0
    %560 = vmatpush2.msra.mxu0 0.0
    %561 = vmatprep.subr.mxu0 0.0
    %562 = vmatpush2.msra.mxu0 0.0
    %563 = vmatprep.subr.mxu0 0.0
    %564 = vmatpush2.msra.mxu0 0.0
    %565 = vmatprep.subr.mxu0 0.0
    %566 = vmatpush2.msra.mxu0 0.0
    %567 = vmatprep.subr.mxu0 0.0
    %568 = vmatpush2.msra.mxu0 0.0
    %569 = vmatprep.subr.mxu0 0.0
    %570 = vmatpush2.msra.mxu0 0.0
    %571 = vmatprep.subr.mxu0 0.0
    %572 = vmatpush2.msra.mxu0 0.0
    %573 = vmatprep.subr.mxu0 0.0
    %574 = vmatpush2.msra.mxu0 0.0
    %575 = vmatprep.subr.mxu0 0.0
    %576 = vmatpush2.msra.mxu0 0.0
    %577 = vmatprep.subr.mxu0 0.0
    %578 = vmatpush2.msra.mxu0 0.0
    %579 = vmatprep.subr.mxu0 0.0
    %580 = vmatpush2.msra.mxu0 0.0
    %581 = vmatprep.subr.mxu0 0.0
    %582 = vmatpush2.msra.mxu0 0.0
    %583 = vmatprep.subr.mxu0 0.0
    %584 = vmatpush2.msra.mxu0 0.0
    %585 = vmatprep.mubr.f32.mxu0 0.0
    %586 = vmatmul.mubr.f32.gmra.mxu0 %v519
    %v587 = vpop.f32.mrf.mxu0
    %v588 = vadd.f32 %v516, %v587
    %v589 = vpop.f32.mrf.mxu0
    %590 = vdwg.mxu0
    %v591 = vld [vmem:[#allocation7] sm:$0x1]
    %v593 = vlaneseq
    %v594 = vshrl.u32 %v593, 7
    %v595 = vsub.s32 0, %v594
    %v596 = vrot.slane %v591, %v595
    %v599 = vsel %vm387, %v510, 0
    %601 = vmatprep.subr.mxu0 0.0
    %602 = vmatpush1.msra.mxu0 0.0
    %603 = vmatprep.subr.mxu0 0.0
    %604 = vmatpush1.msra.mxu0 0.0
    %605 = vmatprep.subr.mxu0 0.0
    %606 = vmatpush1.msra.mxu0 0.0
    %607 = vmatprep.subr.mxu0 0.0
    %608 = vmatpush1.msra.mxu0 0.0
    %609 = vmatprep.subr.mxu0 0.0
    %610 = vmatpush1.msra.mxu0 0.0
    %611 = vmatprep.subr.mxu0 0.0
    %612 = vmatpush1.msra.mxu0 0.0
    %613 = vmatprep.subr.mxu0 0.0
    %614 = vmatpush1.msra.mxu0 0.0
    %615 = vmatprep.subr.mxu0 0.0
    %616 = vmatpush1.msra.mxu0 0.0
    %617 = vmatprep.subr.mxu0 0.0
    %618 = vmatpush1.msra.mxu0 0.0
    %619 = vmatprep.subr.mxu0 0.0
    %620 = vmatpush1.msra.mxu0 0.0
    %621 = vmatprep.subr.mxu0 0.0
    %622 = vmatpush1.msra.mxu0 0.0
    %623 = vmatprep.subr.mxu0 0.0
    %624 = vmatpush1.msra.mxu0 0.0
    %625 = vmatprep.subr.mxu0 0.0
    %626 = vmatpush1.msra.mxu0 0.0
    %627 = vmatprep.subr.mxu0 0.0
    %628 = vmatpush1.msra.mxu0 0.0
    %629 = vmatprep.subr.mxu0 0.0
    %630 = vmatpush1.msra.mxu0 %v494
    %631 = vmatprep.subr.mxu0 0.0
    %632 = vmatpush1.msra.mxu0 %v489
    %633 = vmatprep.subr.mxu0 0.0
    %634 = vmatpush2.msra.mxu0 0.0
    %635 = vmatprep.subr.mxu0 0.0
    %636 = vmatpush2.msra.mxu0 0.0
    %637 = vmatprep.subr.mxu0 0.0
    %638 = vmatpush2.msra.mxu0 0.0
    %639 = vmatprep.subr.mxu0 0.0
    %640 = vmatpush2.msra.mxu0 0.0
    %641 = vmatprep.subr.mxu0 0.0
    %642 = vmatpush2.msra.mxu0 0.0
    %643 = vmatprep.subr.mxu0 0.0
    %644 = vmatpush2.msra.mxu0 0.0
    %645 = vmatprep.subr.mxu0 0.0
    %646 = vmatpush2.msra.mxu0 0.0
    %647 = vmatprep.subr.mxu0 0.0
    %648 = vmatpush2.msra.mxu0 0.0
    %649 = vmatprep.subr.mxu0 0.0
    %650 = vmatpush2.msra.mxu0 0.0
    %651 = vmatprep.subr.mxu0 0.0
    %652 = vmatpush2.msra.mxu0 0.0
    %653 = vmatprep.subr.mxu0 0.0
    %654 = vmatpush2.msra.mxu0 0.0
    %655 = vmatprep.subr.mxu0 0.0
    %656 = vmatpush2.msra.mxu0 0.0
    %657 = vmatprep.subr.mxu0 0.0
    %658 = vmatpush2.msra.mxu0 0.0
    %659 = vmatprep.subr.mxu0 0.0
    %660 = vmatpush2.msra.mxu0 0.0
    %661 = vmatprep.subr.mxu0 0.0
    %662 = vmatpush2.msra.mxu0 0.0
    %663 = vmatprep.subr.mxu0 0.0
    %664 = vmatpush2.msra.mxu0 0.0
    %665 = vmatprep.mubr.f32.mxu0 0.0
    %666 = vmatmul.mubr.f32.gmra.mxu0 %v599
    %v667 = vpop.f32.mrf.mxu0
    %v668 = vadd.f32 %v596, %v667
    %v669 = vpop.f32.mrf.mxu0
    %670 = vdwg.mxu0
    %v671 = vxor.u32 %v588, 2147483648
    %v672 = vmul.f32 %v671, 1.442695
    %v673 = vpow.pop %v672
    %v674 = vadd.f32 %v673, 1.0
    %v675 = vrcp.pop %v674
    %v676 = vmul.f32 1.0, %v675
    %v677 = vxor.u32 %v668, 2147483648
    %v678 = vmul.f32 %v677, 1.442695
    %v679 = vpow.pop %v678
    %v680 = vadd.f32 %v679, 1.0
    %v681 = vrcp.pop %v680
    %v682 = vmul.f32 1.0, %v681
    %v683 = vadd.f32 %v676, %v682
    %v684 = vld [vmem:[%s8] sm:$0xff]
    %v685 = vld [vmem:[%s8 + $0x8] sm:$0xff]
    %v686 = vld [vmem:[%s8 + $0x10] sm:$0xff]
    %v687 = vld [vmem:[%s8 + $0x18] sm:$0xff]
    %v688 = vld [vmem:[%s9] sm:$0x1]
    %v690 = vlaneseq
    %v691 = vshrl.u32 %v690, 7
    %v692 = vsub.s32 0, %v691
    %v693 = vrot.slane %v688, %v692
    %vm695 = vcmask 261120
    %v697 = vsel %vm695, %v683, 0
    %699 = vmatprep.subr.mxu0 0.0
    %700 = vmatpush1.msra.mxu0 0.0
    %701 = vmatprep.subr.mxu0 0.0
    %702 = vmatpush1.msra.mxu0 0.0
    %703 = vmatprep.subr.mxu0 0.0
    %704 = vmatpush1.msra.mxu0 0.0
    %705 = vmatprep.subr.mxu0 0.0
    %706 = vmatpush1.msra.mxu0 0.0
    %707 = vmatprep.subr.mxu0 0.0
    %708 = vmatpush1.msra.mxu0 0.0
    %709 = vmatprep.subr.mxu0 0.0
    %710 = vmatpush1.msra.mxu0 0.0
    %711 = vmatprep.subr.mxu0 0.0
    %712 = vmatpush1.msra.mxu0 0.0
    %713 = vmatprep.subr.mxu0 0.0
    %714 = vmatpush1.msra.mxu0 0.0
    %715 = vmatprep.subr.mxu0 0.0
    %716 = vmatpush1.msra.mxu0 0.0
    %717 = vmatprep.subr.mxu0 0.0
    %718 = vmatpush1.msra.mxu0 0.0
    %719 = vmatprep.subr.mxu0 0.0
    %720 = vmatpush1.msra.mxu0 0.0
    %721 = vmatprep.subr.mxu0 0.0
    %722 = vmatpush1.msra.mxu0 0.0
    %723 = vmatprep.subr.mxu0 0.0
    %724 = vmatpush1.msra.mxu0 %v687
    %725 = vmatprep.subr.mxu0 0.0
    %726 = vmatpush1.msra.mxu0 %v686
    %727 = vmatprep.subr.mxu0 0.0
    %728 = vmatpush1.msra.mxu0 %v685
    %729 = vmatprep.subr.mxu0 0.0
    %730 = vmatpush1.msra.mxu0 %v684
    %731 = vmatprep.subr.mxu0 0.0
    %732 = vmatpush2.msra.mxu0 0.0
    %733 = vmatprep.subr.mxu0 0.0
    %734 = vmatpush2.msra.mxu0 0.0
    %735 = vmatprep.subr.mxu0 0.0
    %736 = vmatpush2.msra.mxu0 0.0
    %737 = vmatprep.subr.mxu0 0.0
    %738 = vmatpush2.msra.mxu0 0.0
    %739 = vmatprep.subr.mxu0 0.0
    %740 = vmatpush2.msra.mxu0 0.0
    %741 = vmatprep.subr.mxu0 0.0
    %742 = vmatpush2.msra.mxu0 0.0
    %743 = vmatprep.subr.mxu0 0.0
    %744 = vmatpush2.msra.mxu0 0.0
    %745 = vmatprep.subr.mxu0 0.0
    %746 = vmatpush2.msra.mxu0 0.0
    %747 = vmatprep.subr.mxu0 0.0
    %748 = vmatpush2.msra.mxu0 0.0
    %749 = vmatprep.subr.mxu0 0.0
    %750 = vmatpush2.msra.mxu0 0.0
    %751 = vmatprep.subr.mxu0 0.0
    %752 = vmatpush2.msra.mxu0 0.0
    %753 = vmatprep.subr.mxu0 0.0
    %754 = vmatpush2.msra.mxu0 0.0
    %755 = vmatprep.subr.mxu0 0.0
    %756 = vmatpush2.msra.mxu0 0.0
    %757 = vmatprep.subr.mxu0 0.0
    %758 = vmatpush2.msra.mxu0 0.0
    %759 = vmatprep.subr.mxu0 0.0
    %760 = vmatpush2.msra.mxu0 0.0
    %761 = vmatprep.subr.mxu0 0.0
    %762 = vmatpush2.msra.mxu0 0.0
    %763 = vmatprep.mubr.f32.mxu0 0.0
    %764 = vmatmul.mubr.f32.gmra.mxu0 %v697
    %v765 = vpop.f32.mrf.mxu0
    %v766 = vadd.f32 %v693, %v765
    %v767 = vpop.f32.mrf.mxu0
    %768 = vdwg.mxu0
    %769 = vst [vmem:[#allocation8] sm:$0xff] %v766
    // Predicated region
    $region54: #{tpu_custom_call.1} parent=1 // pred_check
      _
    $region55: #{tpu_custom_call.1} parent=1 // pred_check_branch
      %771 = sbr.rel (0) target = $region57
    $region56: #{tpu_custom_call.1} parent=1 // pred_region
      %s773 = ssub.s32 128, 128
      %774 = vsyncadd [#allocation4], %s773
      %s776 = sshll.u32 [#allocation8], 4
      %s777 = int_to_ptr.vmem [resolvable:$true] %s776
      %779 = dma.vmem_to_hbm [thread:$0]  %s777, 128, %s10, [#allocation4]
    $region57: #{tpu_custom_call.1} parent=1 // pred_fallthru
      _
    // Predicated region
    $region58: #{tpu_custom_call.1} parent=1 // pred_check
      _
    $region59: #{tpu_custom_call.1} parent=1 // pred_check_branch
      %781 = sbr.rel (0) target = $region61
    $region60: #{tpu_custom_call.1} parent=1 // pred_region
      %782 = dma.done [#allocation4], 128
    $region61: #{tpu_custom_call.1} parent=1 // pred_fallthru
      _
    %783 = vsyncpa [#allocation3], 1
    %784 = vsyncpa [#allocation6], 1
    %785 = vsyncpa [#allocation4], 1

</llo_original>
